<compile_context>
chip_gen: v7x
topology: tpu7x:2x2x1
jax: 0.10.0
libtpu: 0.0.40
codegen_flags: <defaults>
</compile_context>

<pallas_src>
import functools
import math

import jax
import jax.numpy as jnp
from jax import lax
from jax.experimental import pallas as pl
from jax.experimental.pallas import tpu as pltpu


def _round_up(x, m):
    return ((x + m - 1) // m) * m


# ---------------------------------------------------------------------------
# Linear:  y = x @ W + b
# ---------------------------------------------------------------------------
def linear_kernel(x_ref, w_ref, b_ref, o_ref):
    # x_ref: (tm, Din), w_ref: (Din, Dout), b_ref: (1, Dout), o_ref: (tm, Dout)
    # Feed native-dtype operands to the MXU; accumulate in f32.
    y = jnp.dot(x_ref[...], w_ref[...], preferred_element_type=jnp.float32)
    y = y + b_ref[...].astype(jnp.float32)
    o_ref[...] = y.astype(o_ref.dtype)


def linear(x2, w, b, *, tm=256):
    """x2: (M, Din), w: (Din, Dout) (x @ W layout), b: (Dout,) -> (M, Dout)."""
    M, Din = x2.shape
    Dout = w.shape[1]

    # Large row tile (MXU-friendly), clamped to the (8-aligned) problem size;
    # pad the row count instead of asserting divisibility.
    tm_eff = min(tm, _round_up(M, 8))
    m_pad = _round_up(M, tm_eff)
    if m_pad != M:
        x2 = jnp.pad(x2, ((0, m_pad - M), (0, 0)))

    # VMEM footprint estimate (double-buffered x/out tiles + resident weight);
    # only raise the scoped limit when actually needed, capped for v7x (64 MiB).
    est = (2 * tm_eff * Din + 2 * tm_eff * Dout + Din * Dout + Dout) * x2.dtype.itemsize
    vmem_limit = None if est < 32 * 1024 * 1024 else min(2 * est, 64 * 1024 * 1024)
    # TODO(synk): for d_model >= ~4096 add a K-reduction grid axis (f32 scratch
    # accumulator) instead of keeping the full (Din, Dout) weight resident.

    out = pl.pallas_call(
        linear_kernel,
        out_shape=jax.ShapeDtypeStruct((m_pad, Dout), x2.dtype),
        grid_spec=pltpu.PrefetchScalarGridSpec(
            num_scalar_prefetch=0,
            grid=(m_pad // tm_eff,),
            in_specs=[
                pl.BlockSpec((tm_eff, Din), lambda i: (i, 0)),   # activation rows
                pl.BlockSpec((Din, Dout), lambda i: (0, 0)),     # weight (grid-invariant)
                pl.BlockSpec((1, Dout), lambda i: (0, 0)),       # bias (grid-invariant)
            ],
            out_specs=pl.BlockSpec((tm_eff, Dout), lambda i: (i, 0)),
        ),
        compiler_params=pltpu.CompilerParams(
            dimension_semantics=("parallel",),
            vmem_limit_bytes=vmem_limit,
        ),
    )(x2, w, b.reshape(1, Dout))
    return out[:M]


# ---------------------------------------------------------------------------
# Scaled dot-product attention (per batch, per head)
# ---------------------------------------------------------------------------
def attention_kernel(q_ref, k_ref, v_ref, m_ref, ctx_ref, prob_ref, *, inv_scale):
    # q_ref: (Sq, Dh), k_ref/v_ref: (Sk, Dh), m_ref: (Sq, Sk) int32 (nonzero = masked)
    q = q_ref[...]
    k = k_ref[...]
    # scores = (q @ k^T) * (1/sqrt(d_head)); contract last dims (no transpose op).
    scores = lax.dot_general(q, k, (((1,), (1,)), ((), ())),
                             preferred_element_type=jnp.float32) * inv_scale
    # masked_fill_(mask, -10000.0) semantics
    scores = jnp.where(m_ref[...] != 0, jnp.float32(-10000.0), scores)
    # numerically-stable softmax over the key axis (f32 epilogue)
    scores = scores - jnp.max(scores, axis=-1, keepdims=True)
    e = jnp.exp(scores)
    p = e / jnp.sum(e, axis=-1, keepdims=True)
    prob_ref[...] = p.astype(prob_ref.dtype)
    v = v_ref[...]
    ctx_ref[...] = jnp.dot(p.astype(v.dtype), v,
                           preferred_element_type=jnp.float32).astype(ctx_ref.dtype)


def scaled_dot_product_attention(q, k, v, mask_i32, d_head):
    """q,k,v: (B, H, S, Dh); mask_i32: (B, Sq, Sk) int32 (nonzero = masked)."""
    B, H, Sq, Dh = q.shape
    Sk = k.shape[2]
    kernel = functools.partial(attention_kernel, inv_scale=1.0 / math.sqrt(d_head))
    ctx, prob = pl.pallas_call(
        kernel,
        out_shape=(
            jax.ShapeDtypeStruct((B, H, Sq, Dh), q.dtype),
            jax.ShapeDtypeStruct((B, H, Sq, Sk), jnp.float32),
        ),
        grid_spec=pltpu.PrefetchScalarGridSpec(
            num_scalar_prefetch=0,
            grid=(B, H),
            in_specs=[
                pl.BlockSpec((None, None, Sq, Dh), lambda b, h: (b, h, 0, 0)),
                pl.BlockSpec((None, None, Sk, Dh), lambda b, h: (b, h, 0, 0)),
                pl.BlockSpec((None, None, Sk, Dh), lambda b, h: (b, h, 0, 0)),
                # mask is shared across heads (PyTorch repeats it over H)
                pl.BlockSpec((None, Sq, Sk), lambda b, h: (b, 0, 0)),
            ],
            out_specs=(
                pl.BlockSpec((None, None, Sq, Dh), lambda b, h: (b, h, 0, 0)),
                pl.BlockSpec((None, None, Sq, Sk), lambda b, h: (b, h, 0, 0)),
            ),
        ),
        compiler_params=pltpu.CompilerParams(
            dimension_semantics=("parallel", "parallel")),
    )(q, k, v, mask_i32)
    return ctx, prob


# ---------------------------------------------------------------------------
# Full MultiHeadAttention forward
# ---------------------------------------------------------------------------
def multi_head_attention(query, key, value, attn_mask, params, num_att_heads):
    """query/key/value: (B, S, d_model); attn_mask: (B, Sq, Sk), True/nonzero = masked.
    Returns (output (B, Sq, d_model), attn_prob (B, H, Sq, Sk))."""
    B, Sq, d_model = query.shape
    Sk = key.shape[1]
    d_head = d_model // num_att_heads

    def split_heads(x2, S):
        return x2.reshape(B, S, num_att_heads, d_head).transpose(0, 2, 1, 3)

    q = split_heads(linear(query.reshape(B * Sq, d_model), params["wq"], params["bq"]), Sq)
    k = split_heads(linear(key.reshape(B * Sk, d_model), params["wk"], params["bk"]), Sk)
    v = split_heads(linear(value.reshape(B * Sk, d_model), params["wv"], params["bv"]), Sk)

    ctx, attn_prob = scaled_dot_product_attention(
        q, k, v, attn_mask.astype(jnp.int32), d_head)

    ctx = ctx.transpose(0, 2, 1, 3).reshape(B * Sq, num_att_heads * d_head)
    output = linear(ctx, params["wo"], params["bo"]).reshape(B, Sq, d_model)
    return output, attn_prob


# ---------------------------------------------------------------------------
# Pure-JAX reference
# ---------------------------------------------------------------------------
def multi_head_attention_ref(query, key, value, attn_mask, params, num_att_heads):
    B, Sq, d_model = query.shape
    Sk = key.shape[1]
    d_head = d_model // num_att_heads

    def proj(x, w, b, S):
        return (x @ w + b).reshape(B, S, num_att_heads, d_head).transpose(0, 2, 1, 3)

    q = proj(query, params["wq"], params["bq"], Sq)
    k = proj(key, params["wk"], params["bk"], Sk)
    v = proj(value, params["wv"], params["bv"], Sk)
    scores = jnp.einsum("bhqd,bhkd->bhqk", q, k) / math.sqrt(d_head)
    mask = attn_mask[:, None, :, :].astype(bool)
    scores = jnp.where(mask, -10000.0, scores)
    prob = jax.nn.softmax(scores, axis=-1)
    ctx = jnp.einsum("bhqk,bhkd->bhqd", prob, v)
    ctx = ctx.transpose(0, 2, 1, 3).reshape(B, Sq, d_model)
    out = ctx @ params["wo"] + params["bo"]
    return out, prob


if __name__ == "__main__":
    key0 = jax.random.PRNGKey(0)
    B, S, D, H = 2, 8, 32, 4  # d_model=32, num_att_heads=4 -> d_head=8

    ks = jax.random.split(key0, 11)
    query = jax.random.normal(ks[0], (B, S, D), dtype=jnp.float32)
    key_in = jax.random.normal(ks[1], (B, S, D), dtype=jnp.float32)
    value = jax.random.normal(ks[2], (B, S, D), dtype=jnp.float32)

    def init_linear(kw, kb, din, dout):
        w = jax.random.normal(kw, (din, dout), dtype=jnp.float32) * (1.0 / math.sqrt(din))
        b = jax.random.normal(kb, (dout,), dtype=jnp.float32) * 0.01
        return w, b

    wq, bq = init_linear(ks[3], ks[4], D, D)
    wk, bk = init_linear(ks[5], ks[6], D, D)
    wv, bv = init_linear(ks[7], ks[8], D, D)
    wo, bo = init_linear(ks[9], ks[10], D, D)
    params = dict(wq=wq, bq=bq, wk=wk, bk=bk, wv=wv, bv=bv, wo=wo, bo=bo)

    # causal mask: True = masked (matches torch masked_fill_ semantics)
    causal = jnp.arange(S)[None, :] > jnp.arange(S)[:, None]
    attn_mask = jnp.broadcast_to(causal, (B, S, S))

    out, prob = multi_head_attention(query, key_in, value, attn_mask, params, H)
    out = jax.block_until_ready(out)
    prob = jax.block_until_ready(prob)

    ref_out, ref_prob = multi_head_attention_ref(query, key_in, value, attn_mask, params, H)
    assert out.shape == (B, S, D) and prob.shape == (B, H, S, S)
    assert jnp.allclose(prob, ref_prob, atol=1e-4, rtol=1e-4)
    assert jnp.allclose(out, ref_out, atol=1e-3, rtol=1e-3)

    print("KERNEL_OK")
</pallas_src>

<mosaic_0001>
module attributes {stable_mosaic.version = 11 : i64} {
  func.func @linear_kernel(%arg0: i32, %arg1: memref<16x32xf32, #tpu.memory_space<vmem>>, %arg2: memref<32x32xf32, #tpu.memory_space<vmem>>, %arg3: memref<1x32xf32, #tpu.memory_space<vmem>>, %arg4: memref<16x32xf32, #tpu.memory_space<vmem>>) attributes {dimension_semantics = [#tpu.dimension_semantics<parallel>], iteration_bounds = array<i64: 1>, scalar_prefetch = 0 : i64, scratch_operands = 0 : i64, tpu.core_type = #tpu.core_type<tc>, window_params = [{transform_indices = @transform_0, window_bounds = array<i64: 16, 32>}, {pipeline_mode = #tpu.pipeline_mode<synchronous>, transform_indices = @transform_1, window_bounds = array<i64: 32, 32>}, {pipeline_mode = #tpu.pipeline_mode<synchronous>, transform_indices = @transform_2, window_bounds = array<i64: 1, 32>}, {transform_indices = @transform_3, window_bounds = array<i64: 16, 32>}]} {
    %c0 = arith.constant 0 : index
    %c0_0 = arith.constant 0 : index
    %0 = vector.load %arg1[%c0, %c0_0] : memref<16x32xf32, #tpu.memory_space<vmem>>, vector<16x32xf32>
    %c0_1 = arith.constant 0 : index
    %c0_2 = arith.constant 0 : index
    %1 = vector.load %arg2[%c0_1, %c0_2] : memref<32x32xf32, #tpu.memory_space<vmem>>, vector<32x32xf32>
    %cst = arith.constant dense<0.000000e+00> : vector<16x32xf32>
    %2 = tpu.matmul %0, %1, %cst {dimension_numbers = #tpu.dot_dimension_numbers<[1], [0], [0], [1], [0, 0, 1, 1], [], []>} : vector<16x32xf32>, vector<32x32xf32>, vector<16x32xf32> -> vector<16x32xf32>
    %c0_3 = arith.constant 0 : index
    %c0_4 = arith.constant 0 : index
    %3 = vector.load %arg3[%c0_3, %c0_4] : memref<1x32xf32, #tpu.memory_space<vmem>>, vector<1x32xf32>
    %4 = vector.broadcast %3 : vector<1x32xf32> to vector<16x32xf32>
    %5 = arith.addf %2, %4 : vector<16x32xf32>
    %c0_5 = arith.constant 0 : index
    %c0_6 = arith.constant 0 : index
    %6 = vector.load %arg4[%c0_5, %c0_6] : memref<16x32xf32, #tpu.memory_space<vmem>>, vector<16x32xf32>
    tpu.vector_store %arg4[%c0_5, %c0_6], %5 {strides = array<i32>} : memref<16x32xf32, #tpu.memory_space<vmem>>, vector<16x32xf32>,
    return
  }
  func.func @transform_0(%arg0: i32) -> (i32, i32) {
    %c0_i32 = arith.constant 0 : i32
    %c0_i32_0 = arith.constant 0 : i32
    return %arg0, %c0_i32 : i32, i32
  }
  func.func @transform_1(%arg0: i32) -> (i32, i32) {
    %c0_i32 = arith.constant 0 : i32
    %c0_i32_0 = arith.constant 0 : i32
    %c0_i32_1 = arith.constant 0 : i32
    return %c0_i32, %c0_i32_0 : i32, i32
  }
  func.func @transform_2(%arg0: i32) -> (i32, i32) {
    %c0_i32 = arith.constant 0 : i32
    %c0_i32_0 = arith.constant 0 : i32
    %c0_i32_1 = arith.constant 0 : i32
    return %c0_i32, %c0_i32_0 : i32, i32
  }
  func.func @transform_3(%arg0: i32) -> (i32, i32) {
    %c0_i32 = arith.constant 0 : i32
    %c0_i32_0 = arith.constant 0 : i32
    return %arg0, %c0_i32 : i32, i32
  }
}

</mosaic_0001>

<llo_original>
// kernel: tpu_custom_call.1
$region0: #{tpu_custom_call.1}
  #allocation0 [shape = 'u32[]', space=smem, size = 0x4, offset = 0x4, fixed_abs, tag = 'smem constant byte address 0x4 - core index']
  #allocation1 [shape = 'u32[144,128]{1,0:T(1,128)}', space=vmem, size = 0x12000, scoped, tag = 'internal scratch']
  %s0 = inlined_call_operand.hbm [shape: f32[16,32], index: 0, kind: input, shape index: {}]
  %s1 = inlined_call_operand.hbm [shape: f32[32,32], index: 1, kind: input, shape index: {}]
  %s2 = inlined_call_operand.vmem [shape: f32[1,32], index: 2, kind: input, shape index: {}]
  %s3 = inlined_call_operand.hbm [shape: f32[16,32], index: 3, kind: output, shape index: {}]
  %s4 = sld [smem:[#allocation0]]
  $region30: #{tpu_custom_call.1} parent=0
    _
  %s6 = ssub.s32 1, %s4
  %s7 = scalar_select 0, %s6, %s4
  $region1: #{tpu_custom_call.1} parent=0
    #allocation2 [shape = 'u8[8192]{0}', space=vmem, size = 0x2000, scoped, tag = 'input window, operand 0, single buffered']
    #allocation3 [shape = 's32[1]{0}', space=sflag, size = 0x4, scoped, tag = 'scoped memory for tpu_custom_call.1']
    #allocation4 [shape = 's32[1]{0}', space=sflag, size = 0x4, scoped, tag = 'scoped memory for tpu_custom_call.1']
    #allocation5 [shape = 'u8[16384]{0}', space=vmem, size = 0x4000, scoped, tag = 'input window, operand 1, single buffered']
    #allocation6 [shape = 's32[1]{0}', space=sflag, size = 0x4, scoped, tag = 'scoped memory for tpu_custom_call.1']
    #allocation7 [shape = 'u8[8192]{0}', space=vmem, size = 0x2000, scoped, tag = 'output window, operand 0, single buffered']
    %8 = vsyncpa [#allocation3], 0
    %9 = vsyncpa [#allocation6], 0
    %10 = vsyncpa [#allocation4], 0
    // Predicated region
    $region2: #{tpu_custom_call.1} parent=1 // pred_check
      _
    $region3: #{tpu_custom_call.1} parent=1 // pred_check_branch
      %12 = sbr.rel (0) target = $region5
    $region4: #{tpu_custom_call.1} parent=1 // pred_region
      %s14 = ssub.s32 256, 256
      %15 = vsyncadd [#allocation3], %s14
      %s16 = sshll.u32 [#allocation2], 4
      %s17 = int_to_ptr.vmem [resolvable:$true] %s16
      %22 = dma.hbm_to_vmem [thread:$0]  %s0, 256, %s17, [#allocation3], 128, 128, 8
    $region5: #{tpu_custom_call.1} parent=1 // pred_fallthru
      _
    // Predicated region
    $region6: #{tpu_custom_call.1} parent=1 // pred_check
      _
    $region7: #{tpu_custom_call.1} parent=1 // pred_check_branch
      %24 = sbr.rel (0) target = $region9
    $region8: #{tpu_custom_call.1} parent=1 // pred_region
      %s26 = ssub.s32 512, 512
      %27 = vsyncadd [#allocation6], %s26
      %s28 = sshll.u32 [#allocation5], 4
      %s29 = int_to_ptr.vmem [resolvable:$true] %s28
      %34 = dma.hbm_to_vmem [thread:$0]  %s1, 512, %s29, [#allocation6], 128, 128, 8
    $region9: #{tpu_custom_call.1} parent=1 // pred_fallthru
      _
    // Predicated region
    $region10: #{tpu_custom_call.1} parent=1 // pred_check
      _
    $region11: #{tpu_custom_call.1} parent=1 // pred_check_branch
      %36 = sbr.rel (0) target = $region13
    $region12: #{tpu_custom_call.1} parent=1 // pred_region
      _
    $region13: #{tpu_custom_call.1} parent=1 // pred_fallthru
      _
    // Predicated region
    $region14: #{tpu_custom_call.1} parent=1 // pred_check
      _
    $region15: #{tpu_custom_call.1} parent=1 // pred_check_branch
      %38 = sbr.rel (0) target = $region17
    $region16: #{tpu_custom_call.1} parent=1 // pred_region
      %39 = dma.done [#allocation3], 256
    $region17: #{tpu_custom_call.1} parent=1 // pred_fallthru
      _
    // Predicated region
    $region18: #{tpu_custom_call.1} parent=1 // pred_check
      _
    $region19: #{tpu_custom_call.1} parent=1 // pred_check_branch
      %41 = sbr.rel (0) target = $region21
    $region20: #{tpu_custom_call.1} parent=1 // pred_region
      %42 = dma.done [#allocation6], 512
    $region21: #{tpu_custom_call.1} parent=1 // pred_fallthru
      _
    %v43 = vld [vmem:[#allocation2] sm:$0xff]
    %v44 = vld [vmem:[#allocation2 + $0x8] sm:$0xff]
    %v45 = vld [vmem:[#allocation5] sm:$0xff]
    %v46 = vld [vmem:[#allocation5 + $0x8] sm:$0xff]
    %v47 = vld [vmem:[#allocation5 + $0x10] sm:$0xff]
    %v48 = vld [vmem:[#allocation5 + $0x18] sm:$0xff]
    %v49 = vld [vmem:[%s2] sm:$0x1]
    %v51 = vlaneseq
    %v52 = vshrl.u32 %v51, 7
    %v53 = vsub.s32 0, %v52
    %v54 = vrot.slane %v49, %v53
    %vm56 = vcmask 261120
    %v58 = vsel %vm56, %v43, 0
    %v61 = vsel %vm56, %v44, 0
    %63 = vmatprep.subr.mxu0 0.0
    %64 = vmatpush1.msra.mxu0 %v45
    %65 = vmatprep.subr.mxu0 0.0
    %66 = vmatpush1.msra.mxu0 %v46
    %67 = vmatprep.subr.mxu0 0.0
    %68 = vmatpush1.msra.mxu0 %v47
    %69 = vmatprep.subr.mxu0 0.0
    %70 = vmatpush1.msra.mxu0 %v48
    %71 = vmatprep.subr.mxu0 0.0
    %72 = vmatpush1.msra.mxu0 0.0
    %73 = vmatprep.subr.mxu0 0.0
    %74 = vmatpush1.msra.mxu0 0.0
    %75 = vmatprep.subr.mxu0 0.0
    %76 = vmatpush1.msra.mxu0 0.0
    %77 = vmatprep.subr.mxu0 0.0
    %78 = vmatpush1.msra.mxu0 0.0
    %79 = vmatprep.subr.mxu0 0.0
    %80 = vmatpush1.msra.mxu0 0.0
    %81 = vmatprep.subr.mxu0 0.0
    %82 = vmatpush1.msra.mxu0 0.0
    %83 = vmatprep.subr.mxu0 0.0
    %84 = vmatpush1.msra.mxu0 0.0
    %85 = vmatprep.subr.mxu0 0.0
    %86 = vmatpush1.msra.mxu0 0.0
    %87 = vmatprep.subr.mxu0 0.0
    %88 = vmatpush1.msra.mxu0 0.0
    %89 = vmatprep.subr.mxu0 0.0
    %90 = vmatpush1.msra.mxu0 0.0
    %91 = vmatprep.subr.mxu0 0.0
    %92 = vmatpush1.msra.mxu0 0.0
    %93 = vmatprep.subr.mxu0 0.0
    %94 = vmatpush1.msra.mxu0 0.0
    %95 = vmatprep.subr.mxu0 0.0
    %96 = vmatpush1.msra.mxu0 0.0
    %97 = vmatprep.subr.mxu0 0.0
    %98 = vmatpush1.msra.mxu0 0.0
    %99 = vmatprep.subr.mxu0 0.0
    %100 = vmatpush1.msra.mxu0 0.0
    %101 = vmatprep.subr.mxu0 0.0
    %102 = vmatpush1.msra.mxu0 0.0
    %103 = vmatprep.subr.mxu0 0.0
    %104 = vmatpush1.msra.mxu0 0.0
    %105 = vmatprep.subr.mxu0 0.0
    %106 = vmatpush1.msra.mxu0 0.0
    %107 = vmatprep.subr.mxu0 0.0
    %108 = vmatpush1.msra.mxu0 0.0
    %109 = vmatprep.subr.mxu0 0.0
    %110 = vmatpush1.msra.mxu0 0.0
    %111 = vmatprep.subr.mxu0 0.0
    %112 = vmatpush1.msra.mxu0 0.0
    %113 = vmatprep.subr.mxu0 0.0
    %114 = vmatpush1.msra.mxu0 0.0
    %115 = vmatprep.subr.mxu0 0.0
    %116 = vmatpush1.msra.mxu0 0.0
    %117 = vmatprep.subr.mxu0 0.0
    %118 = vmatpush1.msra.mxu0 0.0
    %119 = vmatprep.subr.mxu0 0.0
    %120 = vmatpush1.msra.mxu0 0.0
    %121 = vmatprep.subr.mxu0 0.0
    %122 = vmatpush1.msra.mxu0 0.0
    %123 = vmatprep.subr.mxu0 0.0
    %124 = vmatpush1.msra.mxu0 0.0
    %125 = vmatprep.subr.mxu0 0.0
    %126 = vmatpush1.msra.mxu0 0.0
    %127 = vmatprep.mubr.f32.mxu0 0.0
    %128 = vmatmul.mubr.f32.gmra.mrb[0].mxu0 %v58
    %v129 = vpop.f32.mrb[0].mxu0
    %v130 = vadd.f32 %v54, %v129
    %v131 = vpop.f32.mrb[0].mxu0
    %132 = vmatprep.mubr.f32.mxu0 0.0
    %133 = vmatmul.mubr.f32.gmra.mrb[0].mxu0 %v61
    %v134 = vpop.f32.mrb[0].mxu0
    %v135 = vadd.f32 %v54, %v134
    %v136 = vpop.f32.mrb[0].mxu0
    %137 = vdwg.mxu0
    %138 = vst.msk [vmem:[#allocation7] sm:$0xff] %vm56, %v130
    %139 = vst.msk [vmem:[#allocation7 + $0x8] sm:$0xff] %vm56, %v135
    // Predicated region
    $region22: #{tpu_custom_call.1} parent=1 // pred_check
      _
    $region23: #{tpu_custom_call.1} parent=1 // pred_check_branch
      %141 = sbr.rel (0) target = $region25
    $region24: #{tpu_custom_call.1} parent=1 // pred_region
      %s143 = ssub.s32 256, 256
      %144 = vsyncadd [#allocation4], %s143
      %s145 = sshll.u32 [#allocation7], 4
      %s146 = int_to_ptr.vmem [resolvable:$true] %s145
      %151 = dma.vmem_to_hbm [thread:$0]  %s146, 256, %s3, [#allocation4], 128, 128, 8
    $region25: #{tpu_custom_call.1} parent=1 // pred_fallthru
      _
    // Predicated region
    $region26: #{tpu_custom_call.1} parent=1 // pred_check
      _
    $region27: #{tpu_custom_call.1} parent=1 // pred_check_branch
      %153 = sbr.rel (0) target = $region29
    $region28: #{tpu_custom_call.1} parent=1 // pred_region
      %154 = dma.done [#allocation4], 256
    $region29: #{tpu_custom_call.1} parent=1 // pred_fallthru
      _
    %155 = vsyncpa [#allocation3], 1
    %156 = vsyncpa [#allocation6], 1
    %157 = vsyncpa [#allocation4], 1

</llo_original>
